<compile_context>
chip_gen: v7x
topology: tpu7x:2x2x1
jax: 0.10.0
libtpu: 0.0.40
codegen_flags: <defaults>
</compile_context>

<pallas_src>
import jax
import jax.numpy as jnp
from jax.experimental import pallas as pl
from jax.experimental.pallas import tpu as pltpu


def _round_up(x, m):
    return ((x + m - 1) // m) * m


# ----------------------------------------------------------------------------
# Pallas kernel: feature extractor + fused (mean | value) head
# ----------------------------------------------------------------------------
def policy_kernel(x_ref, w1_ref, w2_ref, wh_ref, b_ref, head_ref):
    # x_ref is (TB, D) f32 with the TRUE input width D; cast to bf16 in VMEM.
    x = x_ref[...].astype(jnp.bfloat16)

    # feature_extractor: Linear -> Tanh -> Linear -> Tanh (f32 accumulate).
    h1 = jnp.tanh(
        jnp.dot(x, w1_ref[...], preferred_element_type=jnp.float32)
        + b_ref[0:1, :]
    ).astype(jnp.bfloat16)          # shed the f32 live range immediately
    h2 = jnp.tanh(
        jnp.dot(h1, w2_ref[...], preferred_element_type=jnp.float32)
        + b_ref[1:2, :]
    ).astype(jnp.bfloat16)

    # fused heads: columns [0:A) = actor mean, column A = critic value,
    # remaining columns are zero padding (never read back by the wrapper).
    head = jnp.dot(h2, wh_ref[...], preferred_element_type=jnp.float32) \
        + b_ref[2:3, :]
    head_ref[...] = head.astype(head_ref.dtype)      # bf16, lane-dense store


# ----------------------------------------------------------------------------
# Wrapper
# ----------------------------------------------------------------------------
def policy_forward(state, params):
    """Returns (action_mean, action_log_std, value) like PolicyNetwork.forward."""
    B, D = state.shape
    A = params["log_std"].shape[1]
    H_PAD = params["w1_t"].shape[1]
    HEAD_PAD = params["wh_t"].shape[1]

    # Batch tile: multiple of 8, <= 512; guarantee >= 2 grid steps once the
    # batch is big enough so the "parallel" axis lights up both v7x TCs, and
    # derive the tile from cdiv(B, n_steps) to keep batch-padding waste small.
    if B <= 16:
        TB = _round_up(max(B, 1), 8)
    else:
        n_steps = max(2, (B + 511) // 512)
        TB = _round_up((B + n_steps - 1) // n_steps, 8)
    B_pad = _round_up(B, TB)

    # Only the batch axis is (maybe) padded; the feature axis keeps width D.
    x = state if B_pad == B else jnp.pad(state, ((0, B_pad - B), (0, 0)))

    grid = (B_pad // TB,)

    def resident(shape):   # weights / packed biases stay VMEM-resident
        return pl.BlockSpec(shape, lambda i: (0, 0))

    flops = 2 * B_pad * (D * H_PAD + H_PAD * H_PAD + H_PAD * HEAD_PAD)
    bytes_accessed = (
        B_pad * D * 4                                               # x (f32)
        + (params["w1_t"].size + params["w2_t"].size
           + params["wh_t"].size) * 2                               # bf16 W
        + params["b_packed"].size * 4                               # f32 bias
        + B_pad * HEAD_PAD * 2                                      # bf16 out
    )

    head = pl.pallas_call(
        policy_kernel,
        out_shape=jax.ShapeDtypeStruct((B_pad, HEAD_PAD), jnp.bfloat16),
        grid=grid,
        in_specs=[
            pl.BlockSpec((TB, D), lambda i: (i, 0)),     # state tile (true D)
            resident((D, H_PAD)),                        # W1
            resident((H_PAD, H_PAD)),                    # W2
            resident((H_PAD, HEAD_PAD)),                 # fused head W
            resident((3, H_PAD)),                        # packed biases (f32)
        ],
        out_specs=pl.BlockSpec((TB, HEAD_PAD), lambda i: (i, 0)),
        compiler_params=pltpu.CompilerParams(
            dimension_semantics=("parallel",)),
        cost_estimate=pl.CostEstimate(
            flops=flops,
            transcendentals=2 * B_pad * H_PAD,
            bytes_accessed=bytes_accessed),
    )(x, params["w1_t"], params["w2_t"], params["wh_t"], params["b_packed"])

    action_mean = head[:B, :A].astype(jnp.float32)
    value = head[:B, A:A + 1].astype(jnp.float32)
    # action_log_std is state-independent -> broadcast outside the kernel.
    action_log_std = jnp.broadcast_to(params["log_std"], action_mean.shape)
    return action_mean, action_log_std, value


# ----------------------------------------------------------------------------
# Deterministic parameter init (mirrors PolicyNetwork._init_weights:
# orthogonal weights gain=1.0, zero biases, zero log_std) with TPU padding.
# ----------------------------------------------------------------------------
def _orthogonal(key, out_dim, in_dim):
    """Orthogonal init for a (out_dim, in_dim) weight, like nn.init.orthogonal_."""
    rows, cols = out_dim, in_dim
    big, small = max(rows, cols), min(rows, cols)
    a = jax.random.normal(key, (big, small), dtype=jnp.float32)
    q, r = jnp.linalg.qr(a)
    q = q * jnp.sign(jnp.diag(r))
    if rows < cols:
        q = q.T
    return q[:rows, :cols]


def init_params(key, input_dim, hidden_dim, output_dim):
    k1, k2, k3, k4 = jax.random.split(key, 4)
    w1 = _orthogonal(k1, hidden_dim, input_dim)    # torch layout (out, in)
    w2 = _orthogonal(k2, hidden_dim, hidden_dim)
    wa = _orthogonal(k3, output_dim, hidden_dim)
    wc = _orthogonal(k4, 1, hidden_dim)

    h_pad = _round_up(hidden_dim, 128)
    head_pad = _round_up(output_dim + 1, 128)
    assert h_pad == head_pad, "packed-bias layout assumes equal padded widths"

    def pad_to(a, rows, cols):
        return jnp.pad(a, ((0, rows - a.shape[0]), (0, cols - a.shape[1])))

    # fused head weight: first A columns = actor mean, next 1 column = critic
    wh = jnp.concatenate([wa.T, wc.T], axis=1)     # (hidden, output+1)

    return {
        # pre-transposed to (in, out); only hidden/head dims padded to 128.
        # Input dim stays at its true width (no 12 -> 128 HBM padding).
        "w1_t": pad_to(w1.T, input_dim, h_pad).astype(jnp.bfloat16),
        "w2_t": pad_to(w2.T, h_pad, h_pad).astype(jnp.bfloat16),
        "wh_t": pad_to(wh, h_pad, head_pad).astype(jnp.bfloat16),
        # packed f32 biases: row 0 = b1, row 1 = b2, row 2 = fused head bias
        "b_packed": jnp.zeros((3, h_pad), jnp.float32),
        "log_std": jnp.zeros((1, output_dim), jnp.float32),
    }


# ----------------------------------------------------------------------------
# Pure-JAX reference (same bf16-weight / f32-accumulate / bf16-store math)
# ----------------------------------------------------------------------------
def policy_forward_ref(state, params):
    A = params["log_std"].shape[1]
    x = state.astype(jnp.bfloat16)
    h1 = jnp.tanh(jnp.dot(x, params["w1_t"],
                          preferred_element_type=jnp.float32)
                  + params["b_packed"][0:1, :]).astype(jnp.bfloat16)
    h2 = jnp.tanh(jnp.dot(h1, params["w2_t"],
                          preferred_element_type=jnp.float32)
                  + params["b_packed"][1:2, :]).astype(jnp.bfloat16)
    head = (jnp.dot(h2, params["wh_t"], preferred_element_type=jnp.float32)
            + params["b_packed"][2:3, :]).astype(jnp.bfloat16)
    mean = head[:, :A].astype(jnp.float32)
    value = head[:, A:A + 1].astype(jnp.float32)
    log_std = jnp.broadcast_to(params["log_std"], mean.shape)
    return mean, log_std, value


if __name__ == "__main__":
    INPUT_DIM, HIDDEN_DIM, OUTPUT_DIM = 12, 32, 4
    BATCH = 8

    key = jax.random.PRNGKey(0)
    k_params, k_state = jax.random.split(key)

    params = init_params(k_params, INPUT_DIM, HIDDEN_DIM, OUTPUT_DIM)
    state = jax.random.normal(k_state, (BATCH, INPUT_DIM), dtype=jnp.float32)

    mean, log_std, value = policy_forward(state, params)
    jax.block_until_ready((mean, log_std, value))

    # sanity check against pure-JAX reference (same bf16/f32 math)
    mean_r, log_std_r, value_r = policy_forward_ref(state, params)
    assert mean.shape == (BATCH, OUTPUT_DIM)
    assert log_std.shape == (BATCH, OUTPUT_DIM)
    assert value.shape == (BATCH, 1)
    assert jnp.allclose(mean, mean_r, atol=2e-2, rtol=2e-2)
    assert jnp.allclose(log_std, log_std_r, atol=1e-6)
    assert jnp.allclose(value, value_r, atol=2e-2, rtol=2e-2)

    print("KERNEL_OK")
</pallas_src>

<mosaic_0001>
module attributes {stable_mosaic.version = 11 : i64} {
  func.func @policy_kernel(%arg0: i32, %arg1: memref<8x12xf32, #tpu.memory_space<vmem>>, %arg2: memref<12x128xbf16, #tpu.memory_space<vmem>>, %arg3: memref<128x128xbf16, #tpu.memory_space<vmem>>, %arg4: memref<128x128xbf16, #tpu.memory_space<vmem>>, %arg5: memref<3x128xf32, #tpu.memory_space<vmem>>, %arg6: memref<8x128xbf16, #tpu.memory_space<vmem>>) attributes {dimension_semantics = [#tpu.dimension_semantics<parallel>], iteration_bounds = array<i64: 1>, scalar_prefetch = 0 : i64, scratch_operands = 0 : i64, tpu.core_type = #tpu.core_type<tc>, window_params = [{transform_indices = @transform_0, window_bounds = array<i64: 8, 12>}, {pipeline_mode = #tpu.pipeline_mode<synchronous>, transform_indices = @transform_1, window_bounds = array<i64: 12, 128>}, {pipeline_mode = #tpu.pipeline_mode<synchronous>, transform_indices = @transform_2, window_bounds = array<i64: 128, 128>}, {pipeline_mode = #tpu.pipeline_mode<synchronous>, transform_indices = @transform_3, window_bounds = array<i64: 128, 128>}, {pipeline_mode = #tpu.pipeline_mode<synchronous>, transform_indices = @transform_4, window_bounds = array<i64: 3, 128>}, {transform_indices = @transform_5, window_bounds = array<i64: 8, 128>}]} {
    %c0 = arith.constant 0 : index
    %c0_0 = arith.constant 0 : index
    %0 = vector.load %arg1[%c0, %c0_0] : memref<8x12xf32, #tpu.memory_space<vmem>>, vector<8x12xf32>
    %1 = arith.truncf %0 : vector<8x12xf32> to vector<8x12xbf16>
    %c0_1 = arith.constant 0 : index
    %c0_2 = arith.constant 0 : index
    %2 = vector.load %arg2[%c0_1, %c0_2] : memref<12x128xbf16, #tpu.memory_space<vmem>>, vector<12x128xbf16>
    %cst = arith.constant dense<0.000000e+00> : vector<8x128xf32>
    %3 = tpu.matmul %1, %2, %cst {dimension_numbers = #tpu.dot_dimension_numbers<[1], [0], [0], [1], [0, 0, 1, 1], [], []>} : vector<8x12xbf16>, vector<12x128xbf16>, vector<8x128xf32> -> vector<8x128xf32>
    %c0_3 = arith.constant 0 : index
    %c0_4 = arith.constant 0 : index
    %4 = vector.load %arg5[%c0_3, %c0_4] : memref<3x128xf32, #tpu.memory_space<vmem>>, vector<1x128xf32>
    %5 = vector.broadcast %4 : vector<1x128xf32> to vector<8x128xf32>
    %6 = arith.addf %3, %5 : vector<8x128xf32>
    %7 = math.tanh %6 : vector<8x128xf32>
    %8 = arith.truncf %7 : vector<8x128xf32> to vector<8x128xbf16>
    %c0_5 = arith.constant 0 : index
    %c0_6 = arith.constant 0 : index
    %9 = vector.load %arg3[%c0_5, %c0_6] : memref<128x128xbf16, #tpu.memory_space<vmem>>, vector<128x128xbf16>
    %cst_7 = arith.constant dense<0.000000e+00> : vector<8x128xf32>
    %10 = tpu.matmul %8, %9, %cst_7 {dimension_numbers = #tpu.dot_dimension_numbers<[1], [0], [0], [1], [0, 0, 1, 1], [], []>} : vector<8x128xbf16>, vector<128x128xbf16>, vector<8x128xf32> -> vector<8x128xf32>
    %c1 = arith.constant 1 : index
    %c0_8 = arith.constant 0 : index
    %11 = vector.load %arg5[%c1, %c0_8] : memref<3x128xf32, #tpu.memory_space<vmem>>, vector<1x128xf32>
    %12 = vector.broadcast %11 : vector<1x128xf32> to vector<8x128xf32>
    %13 = arith.addf %10, %12 : vector<8x128xf32>
    %14 = math.tanh %13 : vector<8x128xf32>
    %15 = arith.truncf %14 : vector<8x128xf32> to vector<8x128xbf16>
    %c0_9 = arith.constant 0 : index
    %c0_10 = arith.constant 0 : index
    %16 = vector.load %arg4[%c0_9, %c0_10] : memref<128x128xbf16, #tpu.memory_space<vmem>>, vector<128x128xbf16>
    %cst_11 = arith.constant dense<0.000000e+00> : vector<8x128xf32>
    %17 = tpu.matmul %15, %16, %cst_11 {dimension_numbers = #tpu.dot_dimension_numbers<[1], [0], [0], [1], [0, 0, 1, 1], [], []>} : vector<8x128xbf16>, vector<128x128xbf16>, vector<8x128xf32> -> vector<8x128xf32>
    %c2 = arith.constant 2 : index
    %c0_12 = arith.constant 0 : index
    %18 = vector.load %arg5[%c2, %c0_12] : memref<3x128xf32, #tpu.memory_space<vmem>>, vector<1x128xf32>
    %19 = vector.broadcast %18 : vector<1x128xf32> to vector<8x128xf32>
    %20 = arith.addf %17, %19 : vector<8x128xf32>
    %21 = arith.truncf %20 : vector<8x128xf32> to vector<8x128xbf16>
    %c0_13 = arith.constant 0 : index
    %c0_14 = arith.constant 0 : index
    %22 = vector.load %arg6[%c0_13, %c0_14] : memref<8x128xbf16, #tpu.memory_space<vmem>>, vector<8x128xbf16>
    tpu.vector_store %arg6[%c0_13, %c0_14], %21 {strides = array<i32>} : memref<8x128xbf16, #tpu.memory_space<vmem>>, vector<8x128xbf16>,
    return
  }
  func.func @transform_0(%arg0: i32) -> (i32, i32) {
    %c0_i32 = arith.constant 0 : i32
    %c0_i32_0 = arith.constant 0 : i32
    return %arg0, %c0_i32 : i32, i32
  }
  func.func @transform_1(%arg0: i32) -> (i32, i32) {
    %c0_i32 = arith.constant 0 : i32
    %c0_i32_0 = arith.constant 0 : i32
    %c0_i32_1 = arith.constant 0 : i32
    return %c0_i32, %c0_i32_0 : i32, i32
  }
  func.func @transform_2(%arg0: i32) -> (i32, i32) {
    %c0_i32 = arith.constant 0 : i32
    %c0_i32_0 = arith.constant 0 : i32
    %c0_i32_1 = arith.constant 0 : i32
    return %c0_i32, %c0_i32_0 : i32, i32
  }
  func.func @transform_3(%arg0: i32) -> (i32, i32) {
    %c0_i32 = arith.constant 0 : i32
    %c0_i32_0 = arith.constant 0 : i32
    %c0_i32_1 = arith.constant 0 : i32
    return %c0_i32, %c0_i32_0 : i32, i32
  }
  func.func @transform_4(%arg0: i32) -> (i32, i32) {
    %c0_i32 = arith.constant 0 : i32
    %c0_i32_0 = arith.constant 0 : i32
    %c0_i32_1 = arith.constant 0 : i32
    return %c0_i32, %c0_i32_0 : i32, i32
  }
  func.func @transform_5(%arg0: i32) -> (i32, i32) {
    %c0_i32 = arith.constant 0 : i32
    %c0_i32_0 = arith.constant 0 : i32
    return %arg0, %c0_i32 : i32, i32
  }
}

</mosaic_0001>

<llo_original>
// kernel: tpu_custom_call.1
$region0: #{tpu_custom_call.1}
  #allocation0 [shape = 'u32[]', space=smem, size = 0x4, offset = 0x4, fixed_abs, tag = 'smem constant byte address 0x4 - core index']
  #allocation1 [shape = 'u32[144,128]{1,0:T(1,128)}', space=vmem, size = 0x12000, scoped, tag = 'internal scratch']
  %s0 = inlined_call_operand.hbm [shape: f32[8,12], index: 0, kind: input, shape index: {}]
  %s1 = inlined_call_operand.hbm [shape: bf16[12,128], index: 1, kind: input, shape index: {}]
  %s2 = inlined_call_operand.hbm [shape: bf16[128,128], index: 2, kind: input, shape index: {}]
  %s3 = inlined_call_operand.hbm [shape: bf16[128,128], index: 3, kind: input, shape index: {}]
  %s4 = inlined_call_operand.vmem [shape: f32[3,128], index: 4, kind: input, shape index: {}]
  %s5 = inlined_call_operand.hbm [shape: bf16[8,128], index: 5, kind: output, shape index: {}]
  %s6 = sld [smem:[#allocation0]]
  $region46: #{tpu_custom_call.1} parent=0
    _
  %s8 = ssub.s32 1, %s6
  %s9 = scalar_select 0, %s8, %s6
  $region1: #{tpu_custom_call.1} parent=0
    #allocation2 [shape = 'u8[4096]{0}', space=vmem, size = 0x1000, scoped, tag = 'input window, operand 0, single buffered']
    #allocation3 [shape = 's32[1]{0}', space=sflag, size = 0x4, scoped, tag = 'scoped memory for tpu_custom_call.1']
    #allocation4 [shape = 's32[1]{0}', space=sflag, size = 0x4, scoped, tag = 'scoped memory for tpu_custom_call.1']
    #allocation5 [shape = 'u8[4096]{0}', space=vmem, size = 0x1000, scoped, tag = 'input window, operand 1, single buffered']
    #allocation6 [shape = 's32[1]{0}', space=sflag, size = 0x4, scoped, tag = 'scoped memory for tpu_custom_call.1']
    #allocation7 [shape = 'u8[32768]{0}', space=vmem, size = 0x8000, scoped, tag = 'input window, operand 2, single buffered']
    #allocation8 [shape = 'u8[32768]{0}', space=vmem, size = 0x8000, scoped, tag = 'input window, operand 3, single buffered']
    #allocation9 [shape = 's32[1]{0}', space=sflag, size = 0x4, scoped, tag = 'scoped memory for tpu_custom_call.1']
    #allocation10 [shape = 'u8[2048]{0}', space=vmem, size = 0x800, scoped, tag = 'output window, operand 0, single buffered']
    %10 = vsyncpa [#allocation3], 0
    %11 = vsyncpa [#allocation6], 0
    %12 = vsyncpa [#allocation9], 0
    %13 = vsyncpa [#allocation4], 0
    // Predicated region
    $region2: #{tpu_custom_call.1} parent=1 // pred_check
      _
    $region3: #{tpu_custom_call.1} parent=1 // pred_check_branch
      %15 = sbr.rel (0) target = $region5
    $region4: #{tpu_custom_call.1} parent=1 // pred_region
      %s17 = ssub.s32 128, 128
      %18 = vsyncadd [#allocation3], %s17
      %s20 = sshll.u32 [#allocation2], 4
      %s21 = int_to_ptr.vmem [resolvable:$true] %s20
      %23 = dma.hbm_to_vmem [thread:$0]  %s0, 128, %s21, [#allocation3]
    $region5: #{tpu_custom_call.1} parent=1 // pred_fallthru
      _
    // Predicated region
    $region6: #{tpu_custom_call.1} parent=1 // pred_check
      _
    $region7: #{tpu_custom_call.1} parent=1 // pred_check_branch
      %25 = sbr.rel (0) target = $region9
    $region8: #{tpu_custom_call.1} parent=1 // pred_region
      %s27 = ssub.s32 128, 128
      %28 = vsyncadd [#allocation6], %s27
      %s29 = sshll.u32 [#allocation5], 4
      %s30 = int_to_ptr.vmem [resolvable:$true] %s29
      %35 = dma.hbm_to_vmem [thread:$0]  %s1, 128, %s30, [#allocation6], 64, 64, 4
    $region9: #{tpu_custom_call.1} parent=1 // pred_fallthru
      _
    // Predicated region
    $region10: #{tpu_custom_call.1} parent=1 // pred_check
      _
    $region11: #{tpu_custom_call.1} parent=1 // pred_check_branch
      %37 = sbr.rel (0) target = $region13
    $region12: #{tpu_custom_call.1} parent=1 // pred_region
      %s39 = ssub.s32 1024, 1024
      %40 = vsyncadd [#allocation6], %s39
      %s41 = sshll.u32 [#allocation7], 4
      %s42 = int_to_ptr.vmem [resolvable:$true] %s41
      %47 = dma.hbm_to_vmem [thread:$0]  %s2, 1024, %s42, [#allocation6], 64, 64, 4
    $region13: #{tpu_custom_call.1} parent=1 // pred_fallthru
      _
    // Predicated region
    $region14: #{tpu_custom_call.1} parent=1 // pred_check
      _
    $region15: #{tpu_custom_call.1} parent=1 // pred_check_branch
      %49 = sbr.rel (0) target = $region17
    $region16: #{tpu_custom_call.1} parent=1 // pred_region
      %s51 = ssub.s32 1024, 1024
      %52 = vsyncadd [#allocation9], %s51
      %s53 = sshll.u32 [#allocation8], 4
      %s54 = int_to_ptr.vmem [resolvable:$true] %s53
      %59 = dma.hbm_to_vmem [thread:$0]  %s3, 1024, %s54, [#allocation9], 64, 64, 4
    $region17: #{tpu_custom_call.1} parent=1 // pred_fallthru
      _
    // Predicated region
    $region18: #{tpu_custom_call.1} parent=1 // pred_check
      _
    $region19: #{tpu_custom_call.1} parent=1 // pred_check_branch
      %61 = sbr.rel (0) target = $region21
    $region20: #{tpu_custom_call.1} parent=1 // pred_region
      _
    $region21: #{tpu_custom_call.1} parent=1 // pred_fallthru
      _
    // Predicated region
    $region22: #{tpu_custom_call.1} parent=1 // pred_check
      _
    $region23: #{tpu_custom_call.1} parent=1 // pred_check_branch
      %63 = sbr.rel (0) target = $region25
    $region24: #{tpu_custom_call.1} parent=1 // pred_region
      %64 = dma.done [#allocation3], 128
    $region25: #{tpu_custom_call.1} parent=1 // pred_fallthru
      _
    // Predicated region
    $region26: #{tpu_custom_call.1} parent=1 // pred_check
      _
    $region27: #{tpu_custom_call.1} parent=1 // pred_check_branch
      %66 = sbr.rel (0) target = $region29
    $region28: #{tpu_custom_call.1} parent=1 // pred_region
      %67 = dma.done [#allocation6], 128
    $region29: #{tpu_custom_call.1} parent=1 // pred_fallthru
      _
    // Predicated region
    $region30: #{tpu_custom_call.1} parent=1 // pred_check
      _
    $region31: #{tpu_custom_call.1} parent=1 // pred_check_branch
      %69 = sbr.rel (0) target = $region33
    $region32: #{tpu_custom_call.1} parent=1 // pred_region
      %70 = dma.done [#allocation6], 1024
    $region33: #{tpu_custom_call.1} parent=1 // pred_fallthru
      _
    // Predicated region
    $region34: #{tpu_custom_call.1} parent=1 // pred_check
      _
    $region35: #{tpu_custom_call.1} parent=1 // pred_check_branch
      %72 = sbr.rel (0) target = $region37
    $region36: #{tpu_custom_call.1} parent=1 // pred_region
      %73 = dma.done [#allocation9], 1024
    $region37: #{tpu_custom_call.1} parent=1 // pred_fallthru
      _
    %v75 = vld [vmem:[#allocation2] sm:$0xff]
    %v76 = vpack.c.bf16 %v75, %v75
    %v77 = vld [vmem:[#allocation5] sm:$0xf]
    %v78 = vld [vmem:[#allocation5 + $0x4] sm:$0x3]
    %v79 = vld [vmem:[%s4] sm:$0x1]
    %v80 = vlaneseq
    %v81 = vshrl.u32 %v80, 7
    %v82 = vsub.s32 0, %v81
    %v83 = vrot.slane %v79, %v82
    %v86 = vunpack.c.l.b16 %v77
    %v87 = vunpack.c.l.b16 %v78
    %v88 = vpack.c.b16 %v87, %v86
    %vm89 = vcmask 97280
    %v91 = vsel %vm89, %v76, 0
    %vm93 = vcmask 1045504
    %v95 = vsel %vm93, %v88, 0
    %97 = vmatprep.subr.bf16.mxu0 0
    %98 = vmatpush1.bf16.msra.mxu0 %v95
    %99 = vmatprep.subr.bf16.mxu0 0
    %100 = vmatpush1.bf16.msra.mxu0 0
    %101 = vmatprep.subr.bf16.mxu0 0
    %102 = vmatpush1.bf16.msra.mxu0 0
    %103 = vmatprep.subr.bf16.mxu0 0
    %104 = vmatpush1.bf16.msra.mxu0 0
    %105 = vmatprep.subr.bf16.mxu0 0
    %106 = vmatpush1.bf16.msra.mxu0 0
    %107 = vmatprep.subr.bf16.mxu0 0
    %108 = vmatpush1.bf16.msra.mxu0 0
    %109 = vmatprep.subr.bf16.mxu0 0
    %110 = vmatpush1.bf16.msra.mxu0 0
    %111 = vmatprep.subr.bf16.mxu0 0
    %112 = vmatpush1.bf16.msra.mxu0 0
    %113 = vmatprep.subr.bf16.mxu0 0
    %114 = vmatpush1.bf16.msra.mxu0 0
    %115 = vmatprep.subr.bf16.mxu0 0
    %116 = vmatpush1.bf16.msra.mxu0 0
    %117 = vmatprep.subr.bf16.mxu0 0
    %118 = vmatpush1.bf16.msra.mxu0 0
    %119 = vmatprep.subr.bf16.mxu0 0
    %120 = vmatpush1.bf16.msra.mxu0 0
    %121 = vmatprep.subr.bf16.mxu0 0
    %122 = vmatpush1.bf16.msra.mxu0 0
    %123 = vmatprep.subr.bf16.mxu0 0
    %124 = vmatpush1.bf16.msra.mxu0 0
    %125 = vmatprep.subr.bf16.mxu0 0
    %126 = vmatpush1.bf16.msra.mxu0 0
    %127 = vmatprep.subr.bf16.mxu0 0
    %128 = vmatpush1.bf16.msra.mxu0 0
    %129 = vmatprep.mubr.bf16.mxu0 0
    %130 = vmatmul.mubr.bf16.gmra.mrb[0].mxu0 %v91
    %v131 = vpop.f32.mrb[0].mxu0
    %v132 = vadd.f32 %v83, %v131
    %v133 = vpop.f32.mrb[0].mxu0
    %v134 = vpop.f32.mrb[0].mxu0
    %v135 = vpop.f32.mrb[0].mxu0
    %136 = vdwg.mxu0
    %v137 = vtanh.pop %v132
    %v138 = vpack.c.bf16 %v137, %v137
    %v139 = vld [vmem:[#allocation7] sm:$0xf]
    %v140 = vld [vmem:[#allocation7 + $0x4] sm:$0xf]
    %v141 = vld [vmem:[#allocation7 + $0x8] sm:$0xf]
    %v142 = vld [vmem:[#allocation7 + $0xc] sm:$0xf]
    %v143 = vld [vmem:[#allocation7 + $0x10] sm:$0xf]
    %v144 = vld [vmem:[#allocation7 + $0x14] sm:$0xf]
    %v145 = vld [vmem:[#allocation7 + $0x18] sm:$0xf]
    %v146 = vld [vmem:[#allocation7 + $0x1c] sm:$0xf]
    %v147 = vld [vmem:[#allocation7 + $0x20] sm:$0xf]
    %v148 = vld [vmem:[#allocation7 + $0x24] sm:$0xf]
    %v149 = vld [vmem:[#allocation7 + $0x28] sm:$0xf]
    %v150 = vld [vmem:[#allocation7 + $0x2c] sm:$0xf]
    %v151 = vld [vmem:[#allocation7 + $0x30] sm:$0xf]
    %v152 = vld [vmem:[#allocation7 + $0x34] sm:$0xf]
    %v153 = vld [vmem:[#allocation7 + $0x38] sm:$0xf]
    %v154 = vld [vmem:[#allocation7 + $0x3c] sm:$0xf]
    %v155 = vld [vmem:[%s4 + $0x1] sm:$0x1]
    %v156 = vlaneseq
    %v157 = vshrl.u32 %v156, 7
    %v158 = vsub.s32 0, %v157
    %v159 = vrot.slane %v155, %v158
    %v176 = vunpack.c.l.b16 %v139
    %v177 = vunpack.c.l.b16 %v140
    %v178 = vunpack.c.l.b16 %v141
    %v179 = vunpack.c.l.b16 %v142
    %v180 = vunpack.c.l.b16 %v143
    %v181 = vunpack.c.l.b16 %v144
    %v182 = vunpack.c.l.b16 %v145
    %v183 = vunpack.c.l.b16 %v146
    %v184 = vunpack.c.l.b16 %v147
    %v185 = vunpack.c.l.b16 %v148
    %v186 = vunpack.c.l.b16 %v149
    %v187 = vunpack.c.l.b16 %v150
    %v188 = vunpack.c.l.b16 %v151
    %v189 = vunpack.c.l.b16 %v152
    %v190 = vunpack.c.l.b16 %v153
    %v191 = vunpack.c.l.b16 %v154
    %v192 = vpack.c.b16 %v177, %v176
    %v193 = vpack.c.b16 %v179, %v178
    %v194 = vpack.c.b16 %v181, %v180
    %v195 = vpack.c.b16 %v183, %v182
    %v196 = vpack.c.b16 %v185, %v184
    %v197 = vpack.c.b16 %v187, %v186
    %v198 = vpack.c.b16 %v189, %v188
    %v199 = vpack.c.b16 %v191, %v190
    %208 = vmatprep.subr.bf16.mxu0 0
    %209 = vmatpush1.bf16.msra.mxu0 %v192
    %210 = vmatprep.subr.bf16.mxu0 0
    %211 = vmatpush1.bf16.msra.mxu0 %v193
    %212 = vmatprep.subr.bf16.mxu0 0
    %213 = vmatpush1.bf16.msra.mxu0 %v194
    %214 = vmatprep.subr.bf16.mxu0 0
    %215 = vmatpush1.bf16.msra.mxu0 %v195
    %216 = vmatprep.subr.bf16.mxu0 0
    %217 = vmatpush1.bf16.msra.mxu0 %v196
    %218 = vmatprep.subr.bf16.mxu0 0
    %219 = vmatpush1.bf16.msra.mxu0 %v197
    %220 = vmatprep.subr.bf16.mxu0 0
    %221 = vmatpush1.bf16.msra.mxu0 %v198
    %222 = vmatprep.subr.bf16.mxu0 0
    %223 = vmatpush1.bf16.msra.mxu0 %v199
    %224 = vmatprep.subr.bf16.mxu0 0
    %225 = vmatpush1.bf16.msra.mxu0 0
    %226 = vmatprep.subr.bf16.mxu0 0
    %227 = vmatpush1.bf16.msra.mxu0 0
    %228 = vmatprep.subr.bf16.mxu0 0
    %229 = vmatpush1.bf16.msra.mxu0 0
    %230 = vmatprep.subr.bf16.mxu0 0
    %231 = vmatpush1.bf16.msra.mxu0 0
    %232 = vmatprep.subr.bf16.mxu0 0
    %233 = vmatpush1.bf16.msra.mxu0 0
    %234 = vmatprep.subr.bf16.mxu0 0
    %235 = vmatpush1.bf16.msra.mxu0 0
    %236 = vmatprep.subr.bf16.mxu0 0
    %237 = vmatpush1.bf16.msra.mxu0 0
    %238 = vmatprep.subr.bf16.mxu0 0
    %239 = vmatpush1.bf16.msra.mxu0 0
    %240 = vmatprep.mubr.bf16.mxu0 0
    %241 = vmatmul.mubr.bf16.gmra.mrb[0].mxu0 %v138
    %v242 = vpop.f32.mrb[0].mxu0
    %v243 = vadd.f32 %v159, %v242
    %v244 = vpop.f32.mrb[0].mxu0
    %v245 = vpop.f32.mrb[0].mxu0
    %v246 = vpop.f32.mrb[0].mxu0
    %247 = vdwg.mxu0
    %v248 = vtanh.pop %v243
    %v249 = vpack.c.bf16 %v248, %v248
    %v250 = vld [vmem:[#allocation8] sm:$0xf]
    %v251 = vld [vmem:[#allocation8 + $0x4] sm:$0xf]
    %v252 = vld [vmem:[#allocation8 + $0x8] sm:$0xf]
    %v253 = vld [vmem:[#allocation8 + $0xc] sm:$0xf]
    %v254 = vld [vmem:[#allocation8 + $0x10] sm:$0xf]
    %v255 = vld [vmem:[#allocation8 + $0x14] sm:$0xf]
    %v256 = vld [vmem:[#allocation8 + $0x18] sm:$0xf]
    %v257 = vld [vmem:[#allocation8 + $0x1c] sm:$0xf]
    %v258 = vld [vmem:[#allocation8 + $0x20] sm:$0xf]
    %v259 = vld [vmem:[#allocation8 + $0x24] sm:$0xf]
    %v260 = vld [vmem:[#allocation8 + $0x28] sm:$0xf]
    %v261 = vld [vmem:[#allocation8 + $0x2c] sm:$0xf]
    %v262 = vld [vmem:[#allocation8 + $0x30] sm:$0xf]
    %v263 = vld [vmem:[#allocation8 + $0x34] sm:$0xf]
    %v264 = vld [vmem:[#allocation8 + $0x38] sm:$0xf]
    %v265 = vld [vmem:[#allocation8 + $0x3c] sm:$0xf]
    %v266 = vld [vmem:[%s4 + $0x2] sm:$0x1]
    %v267 = vlaneseq
    %v268 = vshrl.u32 %v267, 7
    %v269 = vsub.s32 0, %v268
    %v270 = vrot.slane %v266, %v269
    %v287 = vunpack.c.l.b16 %v250
    %v288 = vunpack.c.l.b16 %v251
    %v289 = vunpack.c.l.b16 %v252
    %v290 = vunpack.c.l.b16 %v253
    %v291 = vunpack.c.l.b16 %v254
    %v292 = vunpack.c.l.b16 %v255
    %v293 = vunpack.c.l.b16 %v256
    %v294 = vunpack.c.l.b16 %v257
    %v295 = vunpack.c.l.b16 %v258
    %v296 = vunpack.c.l.b16 %v259
    %v297 = vunpack.c.l.b16 %v260
    %v298 = vunpack.c.l.b16 %v261
    %v299 = vunpack.c.l.b16 %v262
    %v300 = vunpack.c.l.b16 %v263
    %v301 = vunpack.c.l.b16 %v264
    %v302 = vunpack.c.l.b16 %v265
    %v303 = vpack.c.b16 %v288, %v287
    %v304 = vpack.c.b16 %v290, %v289
    %v305 = vpack.c.b16 %v292, %v291
    %v306 = vpack.c.b16 %v294, %v293
    %v307 = vpack.c.b16 %v296, %v295
    %v308 = vpack.c.b16 %v298, %v297
    %v309 = vpack.c.b16 %v300, %v299
    %v310 = vpack.c.b16 %v302, %v301
    %319 = vmatprep.subr.bf16.mxu0 0
    %320 = vmatpush1.bf16.msra.mxu0 %v303
    %321 = vmatprep.subr.bf16.mxu0 0
    %322 = vmatpush1.bf16.msra.mxu0 %v304
    %323 = vmatprep.subr.bf16.mxu0 0
    %324 = vmatpush1.bf16.msra.mxu0 %v305
    %325 = vmatprep.subr.bf16.mxu0 0
    %326 = vmatpush1.bf16.msra.mxu0 %v306
    %327 = vmatprep.subr.bf16.mxu0 0
    %328 = vmatpush1.bf16.msra.mxu0 %v307
    %329 = vmatprep.subr.bf16.mxu0 0
    %330 = vmatpush1.bf16.msra.mxu0 %v308
    %331 = vmatprep.subr.bf16.mxu0 0
    %332 = vmatpush1.bf16.msra.mxu0 %v309
    %333 = vmatprep.subr.bf16.mxu0 0
    %334 = vmatpush1.bf16.msra.mxu0 %v310
    %335 = vmatprep.subr.bf16.mxu0 0
    %336 = vmatpush1.bf16.msra.mxu0 0
    %337 = vmatprep.subr.bf16.mxu0 0
    %338 = vmatpush1.bf16.msra.mxu0 0
    %339 = vmatprep.subr.bf16.mxu0 0
    %340 = vmatpush1.bf16.msra.mxu0 0
    %341 = vmatprep.subr.bf16.mxu0 0
    %342 = vmatpush1.bf16.msra.mxu0 0
    %343 = vmatprep.subr.bf16.mxu0 0
    %344 = vmatpush1.bf16.msra.mxu0 0
    %345 = vmatprep.subr.bf16.mxu0 0
    %346 = vmatpush1.bf16.msra.mxu0 0
    %347 = vmatprep.subr.bf16.mxu0 0
    %348 = vmatpush1.bf16.msra.mxu0 0
    %349 = vmatprep.subr.bf16.mxu0 0
    %350 = vmatpush1.bf16.msra.mxu0 0
    %351 = vmatprep.mubr.bf16.mxu0 0
    %352 = vmatmul.mubr.bf16.gmra.mrb[0].mxu0 %v249
    %v353 = vpop.f32.mrb[0].mxu0
    %v354 = vadd.f32 %v270, %v353
    %v355 = vpop.f32.mrb[0].mxu0
    %v356 = vpop.f32.mrb[0].mxu0
    %v357 = vpop.f32.mrb[0].mxu0
    %358 = vdwg.mxu0
    %v359 = vpack.c.bf16 %v354, %v354
    %360 = vst [vmem:[#allocation10] sm:$0xf] %v359
    // Predicated region
    $region38: #{tpu_custom_call.1} parent=1 // pred_check
      _
    $region39: #{tpu_custom_call.1} parent=1 // pred_check_branch
      %362 = sbr.rel (0) target = $region41
    $region40: #{tpu_custom_call.1} parent=1 // pred_region
      %s364 = ssub.s32 64, 64
      %365 = vsyncadd [#allocation4], %s364
      %s367 = sshll.u32 [#allocation10], 4
      %s368 = int_to_ptr.vmem [resolvable:$true] %s367
      %370 = dma.vmem_to_hbm [thread:$0]  %s368, 64, %s5, [#allocation4]
    $region41: #{tpu_custom_call.1} parent=1 // pred_fallthru
      _
    // Predicated region
    $region42: #{tpu_custom_call.1} parent=1 // pred_check
      _
    $region43: #{tpu_custom_call.1} parent=1 // pred_check_branch
      %372 = sbr.rel (0) target = $region45
    $region44: #{tpu_custom_call.1} parent=1 // pred_region
      %373 = dma.done [#allocation4], 64
    $region45: #{tpu_custom_call.1} parent=1 // pred_fallthru
      _
    %374 = vsyncpa [#allocation3], 1
    %375 = vsyncpa [#allocation6], 1
    %376 = vsyncpa [#allocation9], 1
    %377 = vsyncpa [#allocation4], 1

</llo_original>
